<compile_context>
chip_gen: v7x
topology: tpu7x:2x2x1
jax: 0.10.0
libtpu: 0.0.40
codegen_flags: <defaults>
</compile_context>

<pallas_src>
import jax
import jax.numpy as jnp
from jax import lax
from jax.experimental import pallas as pl
from jax.experimental.pallas import tpu as pltpu

INPUT_SIZE = 4
HIDDEN_SIZE = 20
OUTPUT_SIZE = 3

_HIDDEN_PAD = 24            # round_up(20, 8): sublane-aligned hidden dim
DEFAULT_TB = 32768          # lane tile per grid step (~1.8 MiB VMEM double-buffered)
_CHUNK = 512                # lane chunk for the fused inner loop
_MIN_GRID_STEPS = 2         # let ("parallel",) span both TensorCores on v7x
_MAX_STATIC_CHUNKS = 64     # fully unroll the chunk loop up to this many chunks


def _round_up(n, m):
    return ((n + m - 1) // m) * m


def _choose_tb(b_pad, max_tb, min_steps):
    """Largest lane tile (multiple of 128) that divides b_pad, is <= max_tb, and
    leaves at least `min_steps` grid steps when the batch is big enough."""
    n = b_pad // 128
    cap = min(max(max_tb // 128, 1), n)
    if min_steps > 1 and n >= min_steps:
        cap = min(cap, n // min_steps)
    cap = max(cap, 1)
    for t in range(cap, 0, -1):
        if n % t == 0:
            return t * 128
    return 128


def _choose_chunk(tb):
    for tc in (_CHUNK, 256, 128):
        if tb % tc == 0:
            return tc
    return tb


def _make_kernel(tb, tc):
    n_chunks = tb // tc

    def kernel(w1_ref, b1_ref, w2t_ref, b2_ref, xt_ref, ot_ref):
        # Tiny weights: loaded into vregs once per grid step, hoisted out of the
        # chunk loop (the VMEM blocks themselves are grid-resident via constant
        # index_maps, so they are DMA'd only once).
        w1 = w1_ref[...]                                    # (HIDDEN_PAD, IN)
        b1 = b1_ref[...]                                    # (HIDDEN_PAD, 1)
        w2t = w2t_ref[...]                                  # (HIDDEN_PAD, OUT)
        b2 = b2_ref[...]                                    # (OUT, 1)
        w2_cols = [w2t[:, i:i + 1] for i in range(OUTPUT_SIZE)]   # (HIDDEN_PAD, 1)

        def chunk(start):
            # Layer 1 on the MXU: h^T = W1 @ x^T  (small K=4 / M=24 contraction).
            xc = xt_ref[:, pl.ds(start, tc)].astype(jnp.float32)   # (IN, tc)
            h = jnp.dot(w1, xc, preferred_element_type=jnp.float32)
            h = jnp.maximum(h + b1, 0.0)                            # (HIDDEN_PAD, tc)
            # Layer 2 on the VPU: y[i,:] = b2[i] + sum_j w2[i,j] * h[j,:]
            # (broadcast-MAC + sublane reduce keeps this matmul off the MXU).
            rows = [jnp.sum(w2_cols[i] * h, axis=0, keepdims=True)
                    for i in range(OUTPUT_SIZE)]                    # (1, tc) each
            y = jnp.concatenate(rows, axis=0) + b2                  # (OUT, tc)
            ot_ref[:, pl.ds(start, tc)] = y.astype(ot_ref.dtype)

        if n_chunks <= _MAX_STATIC_CHUNKS:
            # Static unroll with static slice starts: h lives only within a chunk,
            # so it never spills to VMEM.
            for c in range(n_chunks):
                chunk(c * tc)
        else:
            # Rare (pathological batch sizes): rolled loop with aligned dynamic starts.
            def body(c, carry):
                chunk(pl.multiple_of(c * tc, tc))
                return carry
            lax.fori_loop(0, n_chunks, body, 0)

    return kernel


def ann_one_hid_forward_t(xt, w1, b1, w2, b2, *, tb=DEFAULT_TB,
                          min_grid_steps=_MIN_GRID_STEPS):
    """AnnOneHid forward in the TPU-native transposed layout.

    xt: (INPUT_SIZE, B)  activations with batch on the last (lane) axis.
    w1: (HIDDEN_SIZE, INPUT_SIZE), b1: (HIDDEN_SIZE,)   (PyTorch (out, in) layout)
    w2: (OUTPUT_SIZE, HIDDEN_SIZE), b2: (OUTPUT_SIZE,)
    Returns y^T of shape (OUTPUT_SIZE, B).

    No wrapper relayout passes: the batch is padded by at most 127 columns (only
    when B is not a multiple of 128). Activations may be f32 or bf16; compute
    accumulates in f32 and the output keeps the activation dtype.
    """
    in_dim, B = xt.shape
    assert in_dim == INPUT_SIZE and B >= 1

    b_pad = _round_up(B, 128)
    if b_pad != B:                       # <=127 padded columns; dropped again below
        xt = jnp.pad(xt, ((0, 0), (0, b_pad - B)))

    tb = _choose_tb(b_pad, tb, min_grid_steps)
    tc = _choose_chunk(tb)
    grid = (b_pad // tb,)

    # Sublane-align the hidden dim once on the host (tiny, constant-folded under
    # jit); pass W2 transposed so its columns slice out without in-kernel relayout.
    hp = _HIDDEN_PAD - HIDDEN_SIZE
    w1p = jnp.pad(w1.astype(jnp.float32), ((0, hp), (0, 0)))               # (24, 4)
    b1p = jnp.pad(b1.astype(jnp.float32), (0, hp)).reshape(_HIDDEN_PAD, 1)  # (24, 1)
    w2t = jnp.pad(w2.astype(jnp.float32), ((0, 0), (0, hp))).T             # (24, 3)
    b2c = b2.astype(jnp.float32).reshape(OUTPUT_SIZE, 1)                    # (3, 1)

    yt = pl.pallas_call(
        _make_kernel(tb, tc),
        out_shape=jax.ShapeDtypeStruct((OUTPUT_SIZE, b_pad), xt.dtype),
        grid_spec=pltpu.PrefetchScalarGridSpec(
            num_scalar_prefetch=0,
            grid=grid,
            in_specs=[
                # Weights / biases: full arrays, VMEM-resident across the grid.
                pl.BlockSpec((_HIDDEN_PAD, INPUT_SIZE), lambda i: (0, 0)),
                pl.BlockSpec((_HIDDEN_PAD, 1), lambda i: (0, 0)),
                pl.BlockSpec((_HIDDEN_PAD, OUTPUT_SIZE), lambda i: (0, 0)),
                pl.BlockSpec((OUTPUT_SIZE, 1), lambda i: (0, 0)),
                # Activations: tiled along the lane (batch) axis.
                pl.BlockSpec((INPUT_SIZE, tb), lambda i: (0, i)),
            ],
            out_specs=pl.BlockSpec((OUTPUT_SIZE, tb), lambda i: (0, i)),
        ),
        compiler_params=pltpu.CompilerParams(
            dimension_semantics=("parallel",),
        ),
    )(w1p, b1p, w2t, b2c, xt)

    if b_pad != B:
        yt = yt[:, :B]
    return yt


def ann_one_hid_forward(x, w1, b1, w2, b2, **kwargs):
    """PyTorch-compatible layout: x (B, INPUT_SIZE) -> (B, OUTPUT_SIZE).

    Thin compatibility shim: the transposes here are exactly the relayout passes
    the fast path avoids — keep activations in (features, batch) layout and call
    `ann_one_hid_forward_t` directly when chaining TPU ops.
    """
    return ann_one_hid_forward_t(x.T, w1, b1, w2, b2, **kwargs).T


def init_params(key):
    """Deterministic init matching PyTorch nn.Linear default
    (U[-1/sqrt(fan_in), 1/sqrt(fan_in)]); weights in PyTorch (out, in) layout."""
    k1, k2, k3, k4 = jax.random.split(key, 4)
    bound1 = 1.0 / jnp.sqrt(INPUT_SIZE)
    bound2 = 1.0 / jnp.sqrt(HIDDEN_SIZE)
    w1 = jax.random.uniform(k1, (HIDDEN_SIZE, INPUT_SIZE), jnp.float32, -bound1, bound1)
    b1 = jax.random.uniform(k2, (HIDDEN_SIZE,), jnp.float32, -bound1, bound1)
    w2 = jax.random.uniform(k3, (OUTPUT_SIZE, HIDDEN_SIZE), jnp.float32, -bound2, bound2)
    b2 = jax.random.uniform(k4, (OUTPUT_SIZE,), jnp.float32, -bound2, bound2)
    return w1, b1, w2, b2


def reference_forward(x, w1, b1, w2, b2):
    h = jnp.maximum(x @ w1.T + b1, 0.0)
    return h @ w2.T + b2


if __name__ == "__main__":
    key = jax.random.PRNGKey(0)
    kx, kp = jax.random.split(key)
    w1, b1, w2, b2 = init_params(kp)

    # Small PyTorch-layout check (B=8): (B, IN) -> (B, OUT).
    batch = 8
    x = jax.random.normal(kx, (batch, INPUT_SIZE), jnp.float32)
    y = ann_one_hid_forward(x, w1, b1, w2, b2)
    jax.block_until_ready(y)
    y_ref = reference_forward(x, w1, b1, w2, b2)
    assert y.shape == (batch, OUTPUT_SIZE)
    assert jnp.allclose(y, y_ref, atol=1e-5, rtol=1e-5)

    # Transposed fast path: multi-step grid + fused inner chunks (B=4096) and a
    # non-multiple-of-128 batch (B=300) exercising the <=127-column padding path.
    for big_b in (4096, 300):
        xb = jax.random.normal(jax.random.fold_in(kx, big_b),
                               (INPUT_SIZE, big_b), jnp.float32)
        ytb = ann_one_hid_forward_t(xb, w1, b1, w2, b2)
        jax.block_until_ready(ytb)
        ref = reference_forward(xb.T, w1, b1, w2, b2).T
        assert ytb.shape == (OUTPUT_SIZE, big_b)
        assert jnp.allclose(ytb, ref, atol=1e-4, rtol=1e-4)

    print("KERNEL_OK")
</pallas_src>

<mosaic_0001>
module attributes {stable_mosaic.version = 11 : i64} {
  func.func @kernel(%arg0: i32, %arg1: memref<24x4xf32, #tpu.memory_space<vmem>>, %arg2: memref<24x1xf32, #tpu.memory_space<vmem>>, %arg3: memref<24x3xf32, #tpu.memory_space<vmem>>, %arg4: memref<3x1xf32, #tpu.memory_space<vmem>>, %arg5: memref<4x128xf32, #tpu.memory_space<vmem>>, %arg6: memref<3x128xf32, #tpu.memory_space<vmem>>) attributes {dimension_semantics = [#tpu.dimension_semantics<parallel>], iteration_bounds = array<i64: 1>, scalar_prefetch = 0 : i64, scratch_operands = 0 : i64, tpu.core_type = #tpu.core_type<tc>, window_params = [{pipeline_mode = #tpu.pipeline_mode<synchronous>, transform_indices = @transform_0, window_bounds = array<i64: 24, 4>}, {pipeline_mode = #tpu.pipeline_mode<synchronous>, transform_indices = @transform_1, window_bounds = array<i64: 24, 1>}, {pipeline_mode = #tpu.pipeline_mode<synchronous>, transform_indices = @transform_2, window_bounds = array<i64: 24, 3>}, {pipeline_mode = #tpu.pipeline_mode<synchronous>, transform_indices = @transform_3, window_bounds = array<i64: 3, 1>}, {transform_indices = @transform_4, window_bounds = array<i64: 4, 128>}, {transform_indices = @transform_5, window_bounds = array<i64: 3, 128>}]} {
    %c0 = arith.constant 0 : index
    %c0_0 = arith.constant 0 : index
    %0 = vector.load %arg1[%c0, %c0_0] : memref<24x4xf32, #tpu.memory_space<vmem>>, vector<24x4xf32>
    %c0_1 = arith.constant 0 : index
    %c0_2 = arith.constant 0 : index
    %1 = vector.load %arg2[%c0_1, %c0_2] : memref<24x1xf32, #tpu.memory_space<vmem>>, vector<24x1xf32>
    %c0_3 = arith.constant 0 : index
    %c0_4 = arith.constant 0 : index
    %2 = vector.load %arg3[%c0_3, %c0_4] : memref<24x3xf32, #tpu.memory_space<vmem>>, vector<24x3xf32>
    %c0_5 = arith.constant 0 : index
    %c0_6 = arith.constant 0 : index
    %3 = vector.load %arg4[%c0_5, %c0_6] : memref<3x1xf32, #tpu.memory_space<vmem>>, vector<3x1xf32>
    %4 = vector.extract_strided_slice %2 {offsets = [0, 0], sizes = [24, 1], strides = [1, 1]} : vector<24x3xf32> to vector<24x1xf32>
    %5 = vector.extract_strided_slice %2 {offsets = [0, 1], sizes = [24, 1], strides = [1, 1]} : vector<24x3xf32> to vector<24x1xf32>
    %6 = vector.extract_strided_slice %2 {offsets = [0, 2], sizes = [24, 1], strides = [1, 1]} : vector<24x3xf32> to vector<24x1xf32>
    %c0_7 = arith.constant 0 : index
    %c0_8 = arith.constant 0 : index
    %7 = vector.load %arg5[%c0_7, %c0_8] : memref<4x128xf32, #tpu.memory_space<vmem>>, vector<4x128xf32>
    %cst = arith.constant dense<0.000000e+00> : vector<24x128xf32>
    %8 = tpu.matmul %0, %7, %cst {dimension_numbers = #tpu.dot_dimension_numbers<[1], [0], [0], [1], [0, 0, 1, 1], [], []>} : vector<24x4xf32>, vector<4x128xf32>, vector<24x128xf32> -> vector<24x128xf32>
    %9 = vector.broadcast %1 : vector<24x1xf32> to vector<24x128xf32>
    %10 = arith.addf %8, %9 : vector<24x128xf32>
    %cst_9 = arith.constant 0.000000e+00 : f32
    %11 = vector.broadcast %cst_9 : f32 to vector<24x128xf32>
    %12 = arith.maximumf %10, %11 : vector<24x128xf32>
    %13 = vector.broadcast %4 : vector<24x1xf32> to vector<24x128xf32>
    %14 = arith.mulf %13, %12 : vector<24x128xf32>
    %cst_10 = arith.constant dense<0.000000e+00> : vector<128xf32>
    %15 = vector.multi_reduction <add>, %14, %cst_10 [0] : vector<24x128xf32> to vector<128xf32>
    %16 = vector.shape_cast %15 : vector<128xf32> to vector<1x128xf32>
    %17 = vector.broadcast %5 : vector<24x1xf32> to vector<24x128xf32>
    %18 = arith.mulf %17, %12 : vector<24x128xf32>
    %cst_11 = arith.constant dense<0.000000e+00> : vector<128xf32>
    %19 = vector.multi_reduction <add>, %18, %cst_11 [0] : vector<24x128xf32> to vector<128xf32>
    %20 = vector.shape_cast %19 : vector<128xf32> to vector<1x128xf32>
    %21 = vector.broadcast %6 : vector<24x1xf32> to vector<24x128xf32>
    %22 = arith.mulf %21, %12 : vector<24x128xf32>
    %cst_12 = arith.constant dense<0.000000e+00> : vector<128xf32>
    %23 = vector.multi_reduction <add>, %22, %cst_12 [0] : vector<24x128xf32> to vector<128xf32>
    %24 = vector.shape_cast %23 : vector<128xf32> to vector<1x128xf32>
    %25 = tpu.concatenate %16, %20, %24 in 0 : vector<1x128xf32>, vector<1x128xf32>, vector<1x128xf32> -> vector<3x128xf32>
    %26 = vector.broadcast %3 : vector<3x1xf32> to vector<3x128xf32>
    %27 = arith.addf %25, %26 : vector<3x128xf32>
    %c0_13 = arith.constant 0 : index
    %c0_14 = arith.constant 0 : index
    %28 = vector.load %arg6[%c0_13, %c0_14] : memref<3x128xf32, #tpu.memory_space<vmem>>, vector<3x128xf32>
    tpu.vector_store %arg6[%c0_13, %c0_14], %27 {strides = array<i32>} : memref<3x128xf32, #tpu.memory_space<vmem>>, vector<3x128xf32>,
    return
  }
  func.func @transform_0(%arg0: i32) -> (i32, i32) {
    %c0_i32 = arith.constant 0 : i32
    %c0_i32_0 = arith.constant 0 : i32
    %c0_i32_1 = arith.constant 0 : i32
    return %c0_i32, %c0_i32_0 : i32, i32
  }
  func.func @transform_1(%arg0: i32) -> (i32, i32) {
    %c0_i32 = arith.constant 0 : i32
    %c0_i32_0 = arith.constant 0 : i32
    %c0_i32_1 = arith.constant 0 : i32
    return %c0_i32, %c0_i32_0 : i32, i32
  }
  func.func @transform_2(%arg0: i32) -> (i32, i32) {
    %c0_i32 = arith.constant 0 : i32
    %c0_i32_0 = arith.constant 0 : i32
    %c0_i32_1 = arith.constant 0 : i32
    return %c0_i32, %c0_i32_0 : i32, i32
  }
  func.func @transform_3(%arg0: i32) -> (i32, i32) {
    %c0_i32 = arith.constant 0 : i32
    %c0_i32_0 = arith.constant 0 : i32
    %c0_i32_1 = arith.constant 0 : i32
    return %c0_i32, %c0_i32_0 : i32, i32
  }
  func.func @transform_4(%arg0: i32) -> (i32, i32) {
    %c0_i32 = arith.constant 0 : i32
    %c0_i32_0 = arith.constant 0 : i32
    return %c0_i32, %arg0 : i32, i32
  }
  func.func @transform_5(%arg0: i32) -> (i32, i32) {
    %c0_i32 = arith.constant 0 : i32
    %c0_i32_0 = arith.constant 0 : i32
    return %c0_i32, %arg0 : i32, i32
  }
}

</mosaic_0001>

<llo_original>
// kernel: tpu_custom_call.1
$region0: #{tpu_custom_call.1}
  #allocation0 [shape = 'u32[]', space=smem, size = 0x4, offset = 0x4, fixed_abs, tag = 'smem constant byte address 0x4 - core index']
  #allocation1 [shape = 'u32[144,128]{1,0:T(1,128)}', space=vmem, size = 0x12000, scoped, tag = 'internal scratch']
  %s0 = inlined_call_operand.vmem [shape: f32[24,4], index: 0, kind: input, shape index: {}]
  %s1 = inlined_call_operand.vmem [shape: f32[24,1], index: 1, kind: input, shape index: {}]
  %s2 = inlined_call_operand.vmem [shape: f32[24,3], index: 2, kind: input, shape index: {}]
  %s3 = inlined_call_operand.vmem [shape: f32[3,1], index: 3, kind: input, shape index: {}]
  %s4 = inlined_call_operand.vmem [shape: f32[4,128], index: 4, kind: input, shape index: {}]
  %s5 = inlined_call_operand.hbm [shape: f32[3,128], index: 5, kind: output, shape index: {}]
  %s6 = sld [smem:[#allocation0]]
  $region30: #{tpu_custom_call.1} parent=0
    _
  %s8 = ssub.s32 1, %s6
  %s9 = scalar_select 0, %s8, %s6
  $region1: #{tpu_custom_call.1} parent=0
    #allocation2 [shape = 'u8[2048]{0}', space=vmem, size = 0x800, scoped, tag = 'output window, operand 0, single buffered']
    #allocation3 [shape = 's32[1]{0}', space=sflag, size = 0x4, scoped, tag = 'scoped memory for tpu_custom_call.1']
    %10 = vsyncpa [#allocation3], 0
    // Predicated region
    $region2: #{tpu_custom_call.1} parent=1 // pred_check
      _
    $region3: #{tpu_custom_call.1} parent=1 // pred_check_branch
      %12 = sbr.rel (0) target = $region5
    $region4: #{tpu_custom_call.1} parent=1 // pred_region
      _
    $region5: #{tpu_custom_call.1} parent=1 // pred_fallthru
      _
    // Predicated region
    $region6: #{tpu_custom_call.1} parent=1 // pred_check
      _
    $region7: #{tpu_custom_call.1} parent=1 // pred_check_branch
      %14 = sbr.rel (0) target = $region9
    $region8: #{tpu_custom_call.1} parent=1 // pred_region
      _
    $region9: #{tpu_custom_call.1} parent=1 // pred_fallthru
      _
    // Predicated region
    $region10: #{tpu_custom_call.1} parent=1 // pred_check
      _
    $region11: #{tpu_custom_call.1} parent=1 // pred_check_branch
      %16 = sbr.rel (0) target = $region13
    $region12: #{tpu_custom_call.1} parent=1 // pred_region
      _
    $region13: #{tpu_custom_call.1} parent=1 // pred_fallthru
      _
    // Predicated region
    $region14: #{tpu_custom_call.1} parent=1 // pred_check
      _
    $region15: #{tpu_custom_call.1} parent=1 // pred_check_branch
      %18 = sbr.rel (0) target = $region17
    $region16: #{tpu_custom_call.1} parent=1 // pred_region
      _
    $region17: #{tpu_custom_call.1} parent=1 // pred_fallthru
      _
    // Predicated region
    $region18: #{tpu_custom_call.1} parent=1 // pred_check
      _
    $region19: #{tpu_custom_call.1} parent=1 // pred_check_branch
      %20 = sbr.rel (0) target = $region21
    $region20: #{tpu_custom_call.1} parent=1 // pred_region
      _
    $region21: #{tpu_custom_call.1} parent=1 // pred_fallthru
      _
    %v21 = vld [vmem:[%s0] sm:$0xff]
    %v22 = vld [vmem:[%s0 + $0x8] sm:$0xff]
    %v23 = vld [vmem:[%s0 + $0x10] sm:$0xff]
    %v24 = vld [vmem:[%s1] sm:$0xff]
    %v25 = vld [vmem:[%s1 + $0x8] sm:$0xff]
    %v26 = vld [vmem:[%s1 + $0x10] sm:$0xff]
    %v27 = vld [vmem:[%s2] sm:$0xff]
    %v28 = vld [vmem:[%s2 + $0x8] sm:$0xff]
    %v29 = vld [vmem:[%s2 + $0x10] sm:$0xff]
    %v30 = vld [vmem:[%s3] sm:$0x7]
    %v31 = vld [vmem:[%s4] sm:$0xf]
    %33 = vset.pattern.permute.xlu0 0
    %34 = vperm.xlu0 %33, %v24
    %v35 = vpop.permute.xlu0 %34
    %38 = vset.pattern.permute.xlu0 0
    %39 = vperm.xlu0 %38, %v25
    %v40 = vpop.permute.xlu0 %39
    %43 = vset.pattern.permute.xlu0 0
    %44 = vperm.xlu0 %43, %v26
    %v45 = vpop.permute.xlu0 %44
    %vm47 = vcmask 31744
    %v49 = vsel %vm47, %v21, 0
    %v52 = vsel %vm47, %v22, 0
    %v55 = vsel %vm47, %v23, 0
    %vm57 = vcmask 1043456
    %v59 = vsel %vm57, %v31, 0
    %61 = vmatprep.subr.mxu0 0.0
    %62 = vmatpush1.msra.mxu0 %v59
    %63 = vmatprep.subr.mxu0 0.0
    %64 = vmatpush1.msra.mxu0 0.0
    %65 = vmatprep.subr.mxu0 0.0
    %66 = vmatpush1.msra.mxu0 0.0
    %67 = vmatprep.subr.mxu0 0.0
    %68 = vmatpush1.msra.mxu0 0.0
    %69 = vmatprep.subr.mxu0 0.0
    %70 = vmatpush1.msra.mxu0 0.0
    %71 = vmatprep.subr.mxu0 0.0
    %72 = vmatpush1.msra.mxu0 0.0
    %73 = vmatprep.subr.mxu0 0.0
    %74 = vmatpush1.msra.mxu0 0.0
    %75 = vmatprep.subr.mxu0 0.0
    %76 = vmatpush1.msra.mxu0 0.0
    %77 = vmatprep.subr.mxu0 0.0
    %78 = vmatpush1.msra.mxu0 0.0
    %79 = vmatprep.subr.mxu0 0.0
    %80 = vmatpush1.msra.mxu0 0.0
    %81 = vmatprep.subr.mxu0 0.0
    %82 = vmatpush1.msra.mxu0 0.0
    %83 = vmatprep.subr.mxu0 0.0
    %84 = vmatpush1.msra.mxu0 0.0
    %85 = vmatprep.subr.mxu0 0.0
    %86 = vmatpush1.msra.mxu0 0.0
    %87 = vmatprep.subr.mxu0 0.0
    %88 = vmatpush1.msra.mxu0 0.0
    %89 = vmatprep.subr.mxu0 0.0
    %90 = vmatpush1.msra.mxu0 0.0
    %91 = vmatprep.subr.mxu0 0.0
    %92 = vmatpush1.msra.mxu0 0.0
    %93 = vmatprep.subr.mxu0 0.0
    %94 = vmatpush1.msra.mxu0 0.0
    %95 = vmatprep.subr.mxu0 0.0
    %96 = vmatpush1.msra.mxu0 0.0
    %97 = vmatprep.subr.mxu0 0.0
    %98 = vmatpush1.msra.mxu0 0.0
    %99 = vmatprep.subr.mxu0 0.0
    %100 = vmatpush1.msra.mxu0 0.0
    %101 = vmatprep.subr.mxu0 0.0
    %102 = vmatpush1.msra.mxu0 0.0
    %103 = vmatprep.subr.mxu0 0.0
    %104 = vmatpush1.msra.mxu0 0.0
    %105 = vmatprep.subr.mxu0 0.0
    %106 = vmatpush1.msra.mxu0 0.0
    %107 = vmatprep.subr.mxu0 0.0
    %108 = vmatpush1.msra.mxu0 0.0
    %109 = vmatprep.subr.mxu0 0.0
    %110 = vmatpush1.msra.mxu0 0.0
    %111 = vmatprep.subr.mxu0 0.0
    %112 = vmatpush1.msra.mxu0 0.0
    %113 = vmatprep.subr.mxu0 0.0
    %114 = vmatpush1.msra.mxu0 0.0
    %115 = vmatprep.subr.mxu0 0.0
    %116 = vmatpush1.msra.mxu0 0.0
    %117 = vmatprep.subr.mxu0 0.0
    %118 = vmatpush1.msra.mxu0 0.0
    %119 = vmatprep.subr.mxu0 0.0
    %120 = vmatpush1.msra.mxu0 0.0
    %121 = vmatprep.subr.mxu0 0.0
    %122 = vmatpush1.msra.mxu0 0.0
    %123 = vmatprep.subr.mxu0 0.0
    %124 = vmatpush1.msra.mxu0 0.0
    %125 = vmatprep.mubr.f32.mxu0 0.0
    %126 = vmatmul.mubr.f32.gmra.mrb[0].mxu0 %v49
    %v127 = vpop.f32.mrb[0].mxu0
    %v128 = vadd.f32 %v35, %v127
    %v129 = vpop.f32.mrb[0].mxu0
    %130 = vmatprep.mubr.f32.mxu0 0.0
    %131 = vmatmul.mubr.f32.gmra.mrb[0].mxu0 %v52
    %v132 = vpop.f32.mrb[0].mxu0
    %v133 = vadd.f32 %v40, %v132
    %v134 = vpop.f32.mrb[0].mxu0
    %135 = vmatprep.mubr.f32.mxu0 0.0
    %136 = vmatmul.mubr.f32.gmra.mrb[0].mxu0 %v55
    %v137 = vpop.f32.mrb[0].mxu0
    %v138 = vadd.f32 %v45, %v137
    %v139 = vpop.f32.mrb[0].mxu0
    %140 = vdwg.mxu0
    %v141 = vmax.f32 %v128, 0.0
    %v142 = vmax.f32 %v133, 0.0
    %v143 = vmax.f32 %v138, 0.0
    %145 = vset.pattern.permute.xlu0 0
    %146 = vperm.xlu0 %145, %v27
    %v147 = vpop.permute.xlu0 %146
    %150 = vset.pattern.permute.xlu0 0
    %151 = vperm.xlu0 %150, %v28
    %v152 = vpop.permute.xlu0 %151
    %155 = vset.pattern.permute.xlu0 0
    %156 = vperm.xlu0 %155, %v29
    %v157 = vpop.permute.xlu0 %156
    %v159 = vmul.f32 %v147, %v141
    %v160 = vmul.f32 %v152, %v142
    %v161 = vmul.f32 %v157, %v143
    %v162 = vadd.f32 %v159, %v160
    %v163 = vadd.f32 %v162, %v161
    %v164 = vrot.slane %v163, 4
    %v165 = vadd.f32 %v163, %v164
    %v166 = vrot.slane %v165, 2
    %v167 = vadd.f32 %v165, %v166
    %v168 = vrot.slane %v167, 1
    %v169 = vadd.f32 %v167, %v168
    %170 = vset.pattern.permute.xlu0 1
    %171 = vperm.xlu0 %170, %v27
    %v172 = vpop.permute.xlu0 %171
    %174 = vset.pattern.permute.xlu0 1
    %175 = vperm.xlu0 %174, %v28
    %v176 = vpop.permute.xlu0 %175
    %178 = vset.pattern.permute.xlu0 1
    %179 = vperm.xlu0 %178, %v29
    %v180 = vpop.permute.xlu0 %179
    %v182 = vmul.f32 %v172, %v141
    %v183 = vmul.f32 %v176, %v142
    %v184 = vmul.f32 %v180, %v143
    %v185 = vadd.f32 %v182, %v183
    %v186 = vadd.f32 %v185, %v184
    %v187 = vrot.slane %v186, 4
    %v188 = vadd.f32 %v186, %v187
    %v189 = vrot.slane %v188, 2
    %v190 = vadd.f32 %v188, %v189
    %v191 = vrot.slane %v190, 1
    %v192 = vadd.f32 %v190, %v191
    %193 = vset.pattern.permute.xlu0 2
    %194 = vperm.xlu0 %193, %v27
    %v195 = vpop.permute.xlu0 %194
    %197 = vset.pattern.permute.xlu0 2
    %198 = vperm.xlu0 %197, %v28
    %v199 = vpop.permute.xlu0 %198
    %201 = vset.pattern.permute.xlu0 2
    %202 = vperm.xlu0 %201, %v29
    %v203 = vpop.permute.xlu0 %202
    %v205 = vmul.f32 %v195, %v141
    %v206 = vmul.f32 %v199, %v142
    %v207 = vmul.f32 %v203, %v143
    %v208 = vadd.f32 %v205, %v206
    %v209 = vadd.f32 %v208, %v207
    %v210 = vrot.slane %v209, 4
    %v211 = vadd.f32 %v209, %v210
    %v212 = vrot.slane %v211, 2
    %v213 = vadd.f32 %v211, %v212
    %v214 = vrot.slane %v213, 1
    %v215 = vadd.f32 %v213, %v214
    %vm216 = vcmask 1040384
    %v217 = vsel %vm216, %v169, %v192
    %vm218 = vcmask 1041408
    %v219 = vsel %vm218, %v217, %v215
    %221 = vset.pattern.permute.xlu0 0
    %222 = vperm.xlu0 %221, %v30
    %v223 = vpop.permute.xlu0 %222
    %v225 = vadd.f32 %v219, %v223
    %226 = vst [vmem:[#allocation2] sm:$0x7] %v225
    // Predicated region
    $region22: #{tpu_custom_call.1} parent=1 // pred_check
      _
    $region23: #{tpu_custom_call.1} parent=1 // pred_check_branch
      %228 = sbr.rel (0) target = $region25
    $region24: #{tpu_custom_call.1} parent=1 // pred_region
      %s230 = ssub.s32 64, 64
      %231 = vsyncadd [#allocation3], %s230
      %s233 = sshll.u32 [#allocation2], 4
      %s234 = int_to_ptr.vmem [resolvable:$true] %s233
      %236 = dma.vmem_to_hbm [thread:$0]  %s234, 64, %s5, [#allocation3]
    $region25: #{tpu_custom_call.1} parent=1 // pred_fallthru
      _
    // Predicated region
    $region26: #{tpu_custom_call.1} parent=1 // pred_check
      _
    $region27: #{tpu_custom_call.1} parent=1 // pred_check_branch
      %238 = sbr.rel (0) target = $region29
    $region28: #{tpu_custom_call.1} parent=1 // pred_region
      %239 = dma.done [#allocation3], 64
    $region29: #{tpu_custom_call.1} parent=1 // pred_fallthru
      _
    %240 = vsyncpa [#allocation3], 1

</llo_original>
